<compile_context>
chip_gen: v7x
topology: tpu7x:2x2x1
jax: 0.10.0
libtpu: 0.0.40
codegen_flags: <defaults>
</compile_context>

<pallas_src>
import math

import jax
import jax.numpy as jnp
from jax import lax
from jax.experimental import pallas as pl
from jax.experimental.pallas import tpu as pltpu


def _round_up(x, m):
    return ((x + m - 1) // m) * m


def _choose_channel_block(c_pad, ntot):
    """Channel block (multiple of 8): largest that keeps >= 2 channel blocks
    (megacore on v7x) and a modest folded Gram (ntot * cb <= 256)."""
    for cand in (32, 16):
        if c_pad % cand == 0 and c_pad // cand >= 2 and ntot * cand <= 256:
            return cand
    return 8


def _make_coral_kernel(ns, nt, cb):
    """Kernel over grid (channel_block, hw_tile); hw_tile is the reduction axis."""
    a = 1.0 / math.sqrt(ns - 1)   # fold 1/(m-1) of each covariance into the rows
    b = 1.0 / math.sqrt(nt - 1)
    ra, rb = ns * cb, nt * cb

    def per_channel_sq_sum(g, rows_n, cols_n):
        # g: (rows_n*cb, cols_n*cb) channel-folded Gram.  Keep only entries whose
        # row-channel equals their column-channel, square, sum per channel.
        rr, cc = rows_n * cb, cols_n * cb
        rch = lax.broadcasted_iota(jnp.int32, (rr, cc), 0) % cb
        cch = lax.broadcasted_iota(jnp.int32, (rr, cc), 1) % cb
        w = jnp.where(rch == cch, g * g, 0.0)
        w = w.reshape(rows_n, cb, cc)              # split sublane dim (cb % 8 == 0)
        w = jnp.sum(w, axis=2, keepdims=True)      # lane reduce -> (rows_n, cb, 1)
        return jnp.sum(w, axis=0)                  # (cb, 1)

    def kernel(src_ref, trg_ref, o_ref, gaa_ref, gab_ref, gbb_ref):
        # src_ref: (ns, cb, thw)   trg_ref: (nt, cb, thw)
        # o_ref:   (1, cb, 1) per-channel loss (written only at the last hw tile)
        # g*_ref:  folded Gram accumulators, resident across hw tiles
        t = pl.program_id(1)

        @pl.when(t == 0)
        def _():
            gaa_ref[...] = jnp.zeros_like(gaa_ref)
            gab_ref[...] = jnp.zeros_like(gab_ref)
            gbb_ref[...] = jnp.zeros_like(gbb_ref)

        # Whole tiles in one pass: dense per-channel batch means + centering
        # (no per-channel sublane slicing, no concat).
        s = src_ref[...].astype(jnp.float32)                     # (ns, cb, thw)
        q = trg_ref[...].astype(jnp.float32)                     # (nt, cb, thw)
        s = (s - jnp.mean(s, axis=0, keepdims=True)) * a
        q = (q - jnp.mean(q, axis=0, keepdims=True)) * b

        # Fold channels into the matmul rows: layout-preserving merge (cb % 8 == 0).
        sa = s.reshape(ra, s.shape[-1])
        qb = q.reshape(rb, q.shape[-1])

        dn = (((1,), (1,)), ((), ()))                            # X @ Y^T, K = thw
        gaa_ref[...] += lax.dot_general(sa, sa, dn, preferred_element_type=jnp.float32)
        gab_ref[...] += lax.dot_general(sa, qb, dn, preferred_element_type=jnp.float32)
        gbb_ref[...] += lax.dot_general(qb, qb, dn, preferred_element_type=jnp.float32)

        @pl.when(t == pl.num_programs(1) - 1)
        def _():
            # ||cov_s - cov_t||_F^2 = ||A A^T||^2 - 2 ||A B^T||^2 + ||B B^T||^2 per band
            total = (per_channel_sq_sum(gaa_ref[...], ns, ns)
                     - 2.0 * per_channel_sq_sum(gab_ref[...], ns, nt)
                     + per_channel_sq_sum(gbb_ref[...], nt, nt))
            o_ref[0] = jnp.sqrt(jnp.maximum(total, 0.0))

    return kernel


def coral_loss_pallas(source, target):
    """CORAL loss for NCHW source/target feature tensors."""
    ns, c, hs, ws = source.shape
    nt, ct, ht, wt = target.shape
    assert c == ct, "source and target must have the same number of channels"
    assert hs * ws == ht * wt, "source and target must have the same spatial size"
    assert ns > 1 and nt > 1, "CORAL covariance requires batch size > 1"

    hw = hs * ws
    ntot = ns + nt

    c_pad = _round_up(c, 8)                  # zero channels contribute exactly 0
    cb = _choose_channel_block(c_pad, ntot)
    rows_total = ntot * cb
    # TODO(synk): for very large batches (ntot * cb >> 1024) switch to a
    # per-channel batched Gram so the folded accumulators stay small.
    # TODO(synk): when c_pad // cb == 1 the 'parallel' axis has extent 1 and one
    # v7x TensorCore idles; splitting the HW reduction across cores would fix it.

    # HW tile: multiple of 128, ~2M combined src+trg elements per grid step.
    max_elems = 2 * 1024 * 1024
    thw_max = max(128, ((max_elems // rows_total) // 128) * 128)
    n_hw = max(1, -(-hw // thw_max))
    thw = _round_up(-(-hw // n_hw), 128)
    hw_pad = n_hw * thw                      # zero columns contribute exactly 0

    src = source.reshape(ns, c, hw)          # NCHW read directly; no wrapper transpose
    trg = target.reshape(nt, c, hw)
    if c_pad != c or hw_pad != hw:
        src = jnp.pad(src, ((0, 0), (0, c_pad - c), (0, hw_pad - hw)))
        trg = jnp.pad(trg, ((0, 0), (0, c_pad - c), (0, hw_pad - hw)))

    itemsize = max(jnp.dtype(src.dtype).itemsize, jnp.dtype(trg.dtype).itemsize)
    in_bytes = rows_total * thw * itemsize                  # one combined input buffer
    work_bytes = rows_total * thw * 4                       # f32 centered temporaries
    acc_bytes = 4 * ((ns * cb) ** 2 + (ns * cb) * (nt * cb) + (nt * cb) ** 2)
    vmem_limit = 2 * in_bytes + 3 * work_bytes + 2 * acc_bytes + (8 << 20)
    vmem_limit = int(min(48 << 20, max(16 << 20, vmem_limit)))   # v7x-safe cap

    out = pl.pallas_call(
        _make_coral_kernel(ns, nt, cb),
        out_shape=jax.ShapeDtypeStruct((c_pad // cb, cb, 1), jnp.float32),
        grid=(c_pad // cb, n_hw),
        in_specs=[
            pl.BlockSpec((ns, cb, thw), lambda i, t: (0, i, t)),
            pl.BlockSpec((nt, cb, thw), lambda i, t: (0, i, t)),
        ],
        out_specs=pl.BlockSpec((1, cb, 1), lambda i, t: (i, 0, 0)),
        scratch_shapes=[
            pltpu.VMEM((ns * cb, ns * cb), jnp.float32),
            pltpu.VMEM((ns * cb, nt * cb), jnp.float32),
            pltpu.VMEM((nt * cb, nt * cb), jnp.float32),
        ],
        compiler_params=pltpu.CompilerParams(
            dimension_semantics=("parallel", "arbitrary"),
            vmem_limit_bytes=vmem_limit,
        ),
    )(src, trg)

    return jnp.sum(out) * jnp.float32(1.0 / (4.0 * float(c) ** 2))


def _coral_loss_reference(source, target):
    """Pure-JAX reference mirroring the PyTorch implementation."""
    ns, c, hs, ws = source.shape
    nt, _, ht, wt = target.shape
    loss = 0.0
    for band in range(c):
        s = source[:, band].reshape(ns, hs * ws).astype(jnp.float32)
        t = target[:, band].reshape(nt, ht * wt).astype(jnp.float32)

        def cov(m):
            bs = m.shape[0]
            rt = jnp.ones((1, bs), jnp.float32) @ m
            rt = rt.T @ rt
            return (m.T @ m - rt / bs) / (bs - 1)

        d = cov(s) - cov(t)
        loss += jnp.sqrt(jnp.sum(d ** 2))
    return loss / (4 * c ** 2)


class CoralLoss:
    """Thin wrapper mirroring the nn.Module interface."""

    def __init__(self, uda_lambda, device="tpu"):
        self.uda_lambda = uda_lambda  # stored but unused in forward (matches PyTorch)
        self.device = device

    def __call__(self, source, target):
        return coral_loss_pallas(source, target)


if __name__ == "__main__":
    key = jax.random.PRNGKey(0)
    k1, k2 = jax.random.split(key)

    # Small NCHW shapes: batch=2, channels=4, spatial=16x16
    source = jax.random.normal(k1, (2, 4, 16, 16), dtype=jnp.float32)
    target = jax.random.normal(k2, (2, 4, 16, 16), dtype=jnp.float32)

    module = CoralLoss(uda_lambda=0.5)
    loss = jax.block_until_ready(module(source, target))

    ref = jax.block_until_ready(_coral_loss_reference(source, target))
    # Gram-trace formulation differs from the raw M^T M formulation only by
    # f32 rounding.
    assert jnp.allclose(loss, ref, rtol=1e-3, atol=1e-3), (loss, ref)

    print("KERNEL_OK")
</pallas_src>

<mosaic_0001>
module attributes {stable_mosaic.version = 11 : i64} {
  func.func @kernel(%arg0: i32, %arg1: i32, %arg2: memref<2x8x256xf32, #tpu.memory_space<vmem>>, %arg3: memref<2x8x256xf32, #tpu.memory_space<vmem>>, %arg4: memref<1x8x1xf32, #tpu.memory_space<vmem>>, %arg5: memref<16x16xf32, #tpu.memory_space<vmem>>, %arg6: memref<16x16xf32, #tpu.memory_space<vmem>>, %arg7: memref<16x16xf32, #tpu.memory_space<vmem>>) attributes {dimension_semantics = [#tpu.dimension_semantics<parallel>, #tpu.dimension_semantics<arbitrary>], iteration_bounds = array<i64: 1, 1>, scalar_prefetch = 0 : i64, scratch_operands = 3 : i64, tpu.core_type = #tpu.core_type<tc>, window_params = [{transform_indices = @transform_0, window_bounds = array<i64: 2, 8, 256>}, {transform_indices = @transform_1, window_bounds = array<i64: 2, 8, 256>}, {transform_indices = @transform_2, window_bounds = array<i64: 1, 8, 1>}]} {
    %c0_i32 = arith.constant 0 : i32
    %0 = arith.cmpi eq, %arg1, %c0_i32 : i32
    %1 = arith.extui %0 : i1 to i32
    %c0_i32_0 = arith.constant 0 : i32
    %2 = arith.cmpi ne, %1, %c0_i32_0 : i32
    scf.if %2 {
      %cst_28 = arith.constant 0.000000e+00 : f32
      %38 = vector.broadcast %cst_28 : f32 to vector<16x16xf32>
      %c0_29 = arith.constant 0 : index
      %c0_30 = arith.constant 0 : index
      %39 = vector.load %arg5[%c0_29, %c0_30] : memref<16x16xf32, #tpu.memory_space<vmem>>, vector<16x16xf32>
      tpu.vector_store %arg5[%c0_29, %c0_30], %38 {strides = array<i32>} : memref<16x16xf32, #tpu.memory_space<vmem>>, vector<16x16xf32>,
      %cst_31 = arith.constant 0.000000e+00 : f32
      %40 = vector.broadcast %cst_31 : f32 to vector<16x16xf32>
      %c0_32 = arith.constant 0 : index
      %c0_33 = arith.constant 0 : index
      %41 = vector.load %arg6[%c0_32, %c0_33] : memref<16x16xf32, #tpu.memory_space<vmem>>, vector<16x16xf32>
      tpu.vector_store %arg6[%c0_32, %c0_33], %40 {strides = array<i32>} : memref<16x16xf32, #tpu.memory_space<vmem>>, vector<16x16xf32>,
      %cst_34 = arith.constant 0.000000e+00 : f32
      %42 = vector.broadcast %cst_34 : f32 to vector<16x16xf32>
      %c0_35 = arith.constant 0 : index
      %c0_36 = arith.constant 0 : index
      %43 = vector.load %arg7[%c0_35, %c0_36] : memref<16x16xf32, #tpu.memory_space<vmem>>, vector<16x16xf32>
      tpu.vector_store %arg7[%c0_35, %c0_36], %42 {strides = array<i32>} : memref<16x16xf32, #tpu.memory_space<vmem>>, vector<16x16xf32>,
    } else {
    }
    %c0 = arith.constant 0 : index
    %c0_1 = arith.constant 0 : index
    %c0_2 = arith.constant 0 : index
    %3 = vector.load %arg2[%c0, %c0_1, %c0_2] : memref<2x8x256xf32, #tpu.memory_space<vmem>>, vector<2x8x256xf32>
    %c0_3 = arith.constant 0 : index
    %c0_4 = arith.constant 0 : index
    %c0_5 = arith.constant 0 : index
    %4 = vector.load %arg3[%c0_3, %c0_4, %c0_5] : memref<2x8x256xf32, #tpu.memory_space<vmem>>, vector<2x8x256xf32>
    %cst = arith.constant dense<0.000000e+00> : vector<8x256xf32>
    %5 = vector.multi_reduction <add>, %3, %cst [0] : vector<2x8x256xf32> to vector<8x256xf32>
    %6 = vector.shape_cast %5 : vector<8x256xf32> to vector<1x8x256xf32>
    %cst_6 = arith.constant 2.000000e+00 : f32
    %7 = vector.broadcast %cst_6 : f32 to vector<1x8x256xf32>
    %8 = arith.divf %6, %7 : vector<1x8x256xf32>
    %9 = vector.broadcast %8 : vector<1x8x256xf32> to vector<2x8x256xf32>
    %10 = arith.subf %3, %9 : vector<2x8x256xf32>
    %cst_7 = arith.constant 1.000000e+00 : f32
    %11 = vector.broadcast %cst_7 : f32 to vector<2x8x256xf32>
    %12 = arith.mulf %10, %11 : vector<2x8x256xf32>
    %cst_8 = arith.constant dense<0.000000e+00> : vector<8x256xf32>
    %13 = vector.multi_reduction <add>, %4, %cst_8 [0] : vector<2x8x256xf32> to vector<8x256xf32>
    %14 = vector.shape_cast %13 : vector<8x256xf32> to vector<1x8x256xf32>
    %cst_9 = arith.constant 2.000000e+00 : f32
    %15 = vector.broadcast %cst_9 : f32 to vector<1x8x256xf32>
    %16 = arith.divf %14, %15 : vector<1x8x256xf32>
    %17 = vector.broadcast %16 : vector<1x8x256xf32> to vector<2x8x256xf32>
    %18 = arith.subf %4, %17 : vector<2x8x256xf32>
    %cst_10 = arith.constant 1.000000e+00 : f32
    %19 = vector.broadcast %cst_10 : f32 to vector<2x8x256xf32>
    %20 = arith.mulf %18, %19 : vector<2x8x256xf32>
    %21 = vector.shape_cast %12 : vector<2x8x256xf32> to vector<16x256xf32>
    %22 = vector.shape_cast %20 : vector<2x8x256xf32> to vector<16x256xf32>
    %c0_11 = arith.constant 0 : index
    %c0_12 = arith.constant 0 : index
    %23 = vector.load %arg5[%c0_11, %c0_12] : memref<16x16xf32, #tpu.memory_space<vmem>>, vector<16x16xf32>
    %cst_13 = arith.constant dense<0.000000e+00> : vector<16x16xf32>
    %24 = tpu.matmul %21, %21, %cst_13 {dimension_numbers = #tpu.dot_dimension_numbers<[1], [1], [0], [0], [0, 0, 1, 0], [], []>} : vector<16x256xf32>, vector<16x256xf32>, vector<16x16xf32> -> vector<16x16xf32>
    %25 = arith.addf %23, %24 : vector<16x16xf32>
    %c0_14 = arith.constant 0 : index
    %c0_15 = arith.constant 0 : index
    %26 = vector.load %arg5[%c0_14, %c0_15] : memref<16x16xf32, #tpu.memory_space<vmem>>, vector<16x16xf32>
    tpu.vector_store %arg5[%c0_14, %c0_15], %25 {strides = array<i32>} : memref<16x16xf32, #tpu.memory_space<vmem>>, vector<16x16xf32>,
    %c0_16 = arith.constant 0 : index
    %c0_17 = arith.constant 0 : index
    %27 = vector.load %arg6[%c0_16, %c0_17] : memref<16x16xf32, #tpu.memory_space<vmem>>, vector<16x16xf32>
    %cst_18 = arith.constant dense<0.000000e+00> : vector<16x16xf32>
    %28 = tpu.matmul %21, %22, %cst_18 {dimension_numbers = #tpu.dot_dimension_numbers<[1], [1], [0], [0], [0, 0, 1, 0], [], []>} : vector<16x256xf32>, vector<16x256xf32>, vector<16x16xf32> -> vector<16x16xf32>
    %29 = arith.addf %27, %28 : vector<16x16xf32>
    %c0_19 = arith.constant 0 : index
    %c0_20 = arith.constant 0 : index
    %30 = vector.load %arg6[%c0_19, %c0_20] : memref<16x16xf32, #tpu.memory_space<vmem>>, vector<16x16xf32>
    tpu.vector_store %arg6[%c0_19, %c0_20], %29 {strides = array<i32>} : memref<16x16xf32, #tpu.memory_space<vmem>>, vector<16x16xf32>,
    %c0_21 = arith.constant 0 : index
    %c0_22 = arith.constant 0 : index
    %31 = vector.load %arg7[%c0_21, %c0_22] : memref<16x16xf32, #tpu.memory_space<vmem>>, vector<16x16xf32>
    %cst_23 = arith.constant dense<0.000000e+00> : vector<16x16xf32>
    %32 = tpu.matmul %22, %22, %cst_23 {dimension_numbers = #tpu.dot_dimension_numbers<[1], [1], [0], [0], [0, 0, 1, 0], [], []>} : vector<16x256xf32>, vector<16x256xf32>, vector<16x16xf32> -> vector<16x16xf32>
    %33 = arith.addf %31, %32 : vector<16x16xf32>
    %c0_24 = arith.constant 0 : index
    %c0_25 = arith.constant 0 : index
    %34 = vector.load %arg7[%c0_24, %c0_25] : memref<16x16xf32, #tpu.memory_space<vmem>>, vector<16x16xf32>
    tpu.vector_store %arg7[%c0_24, %c0_25], %33 {strides = array<i32>} : memref<16x16xf32, #tpu.memory_space<vmem>>, vector<16x16xf32>,
    %c0_i32_26 = arith.constant 0 : i32
    %35 = arith.cmpi eq, %arg1, %c0_i32_26 : i32
    %36 = arith.extui %35 : i1 to i32
    %c0_i32_27 = arith.constant 0 : i32
    %37 = arith.cmpi ne, %36, %c0_i32_27 : i32
    scf.if %37 {
      %c0_28 = arith.constant 0 : index
      %c0_29 = arith.constant 0 : index
      %38 = vector.load %arg5[%c0_28, %c0_29] : memref<16x16xf32, #tpu.memory_space<vmem>>, vector<16x16xf32>
      %39 = tpu.iota {dimensions = array<i32: 0>} : vector<16x16xi32>
      %c8_i32 = arith.constant 8 : i32
      %c0_i32_30 = arith.constant 0 : i32
      %40 = arith.cmpi eq, %c8_i32, %c0_i32_30 : i32
      %c1_i32 = arith.constant 1 : i32
      %41 = arith.select %40, %c1_i32, %c8_i32 : i32
      %42 = vector.broadcast %41 : i32 to vector<16x16xi32>
      %43 = arith.remsi %39, %42 : vector<16x16xi32>
      %c0_i32_31 = arith.constant 0 : i32
      %44 = vector.broadcast %c0_i32_31 : i32 to vector<16x16xi32>
      %45 = arith.cmpi ne, %43, %44 : vector<16x16xi32>
      %c0_i32_32 = arith.constant 0 : i32
      %46 = vector.broadcast %c0_i32_32 : i32 to vector<16x16xi32>
      %47 = arith.cmpi slt, %43, %46 : vector<16x16xi32>
      %c0_i32_33 = arith.constant 0 : i32
      %48 = arith.cmpi slt, %41, %c0_i32_33 : i32
      %49 = vector.broadcast %48 : i1 to vector<16x16xi1>
      %50 = vector.broadcast %49 : vector<16x16xi1> to vector<16x16xi1>
      %51 = arith.xori %47, %50 : vector<16x16xi1>
      %52 = arith.andi %51, %45 : vector<16x16xi1>
      %53 = vector.broadcast %41 : i32 to vector<16x16xi32>
      %54 = arith.addi %43, %53 : vector<16x16xi32>
      %55 = arith.select %52, %54, %43 : vector<16x16xi1>, vector<16x16xi32>
      %56 = tpu.iota {dimensions = array<i32: 1>} : vector<16x16xi32>
      %c8_i32_34 = arith.constant 8 : i32
      %c0_i32_35 = arith.constant 0 : i32
      %57 = arith.cmpi eq, %c8_i32_34, %c0_i32_35 : i32
      %c1_i32_36 = arith.constant 1 : i32
      %58 = arith.select %57, %c1_i32_36, %c8_i32_34 : i32
      %59 = vector.broadcast %58 : i32 to vector<16x16xi32>
      %60 = arith.remsi %56, %59 : vector<16x16xi32>
      %c0_i32_37 = arith.constant 0 : i32
      %61 = vector.broadcast %c0_i32_37 : i32 to vector<16x16xi32>
      %62 = arith.cmpi ne, %60, %61 : vector<16x16xi32>
      %c0_i32_38 = arith.constant 0 : i32
      %63 = vector.broadcast %c0_i32_38 : i32 to vector<16x16xi32>
      %64 = arith.cmpi slt, %60, %63 : vector<16x16xi32>
      %c0_i32_39 = arith.constant 0 : i32
      %65 = arith.cmpi slt, %58, %c0_i32_39 : i32
      %66 = vector.broadcast %65 : i1 to vector<16x16xi1>
      %67 = vector.broadcast %66 : vector<16x16xi1> to vector<16x16xi1>
      %68 = arith.xori %64, %67 : vector<16x16xi1>
      %69 = arith.andi %68, %62 : vector<16x16xi1>
      %70 = vector.broadcast %58 : i32 to vector<16x16xi32>
      %71 = arith.addi %60, %70 : vector<16x16xi32>
      %72 = arith.select %69, %71, %60 : vector<16x16xi1>, vector<16x16xi32>
      %73 = arith.cmpi eq, %55, %72 : vector<16x16xi32>
      %74 = arith.mulf %38, %38 : vector<16x16xf32>
      %cst_40 = arith.constant 0.000000e+00 : f32
      %75 = vector.broadcast %cst_40 : f32 to vector<16x16xf32>
      %76 = arith.select %73, %74, %75 : vector<16x16xi1>, vector<16x16xf32>
      %77 = vector.shape_cast %76 : vector<16x16xf32> to vector<2x8x16xf32>
      %cst_41 = arith.constant dense<0.000000e+00> : vector<2x8xf32>
      %78 = vector.multi_reduction <add>, %77, %cst_41 [2] : vector<2x8x16xf32> to vector<2x8xf32>
      %79 = vector.shape_cast %78 : vector<2x8xf32> to vector<2x8x1xf32>
      %cst_42 = arith.constant dense<0.000000e+00> : vector<8x1xf32>
      %80 = vector.multi_reduction <add>, %79, %cst_42 [0] : vector<2x8x1xf32> to vector<8x1xf32>
      %c0_43 = arith.constant 0 : index
      %c0_44 = arith.constant 0 : index
      %81 = vector.load %arg6[%c0_43, %c0_44] : memref<16x16xf32, #tpu.memory_space<vmem>>, vector<16x16xf32>
      %82 = tpu.iota {dimensions = array<i32: 0>} : vector<16x16xi32>
      %c8_i32_45 = arith.constant 8 : i32
      %c0_i32_46 = arith.constant 0 : i32
      %83 = arith.cmpi eq, %c8_i32_45, %c0_i32_46 : i32
      %c1_i32_47 = arith.constant 1 : i32
      %84 = arith.select %83, %c1_i32_47, %c8_i32_45 : i32
      %85 = vector.broadcast %84 : i32 to vector<16x16xi32>
      %86 = arith.remsi %82, %85 : vector<16x16xi32>
      %c0_i32_48 = arith.constant 0 : i32
      %87 = vector.broadcast %c0_i32_48 : i32 to vector<16x16xi32>
      %88 = arith.cmpi ne, %86, %87 : vector<16x16xi32>
      %c0_i32_49 = arith.constant 0 : i32
      %89 = vector.broadcast %c0_i32_49 : i32 to vector<16x16xi32>
      %90 = arith.cmpi slt, %86, %89 : vector<16x16xi32>
      %c0_i32_50 = arith.constant 0 : i32
      %91 = arith.cmpi slt, %84, %c0_i32_50 : i32
      %92 = vector.broadcast %91 : i1 to vector<16x16xi1>
      %93 = vector.broadcast %92 : vector<16x16xi1> to vector<16x16xi1>
      %94 = arith.xori %90, %93 : vector<16x16xi1>
      %95 = arith.andi %94, %88 : vector<16x16xi1>
      %96 = vector.broadcast %84 : i32 to vector<16x16xi32>
      %97 = arith.addi %86, %96 : vector<16x16xi32>
      %98 = arith.select %95, %97, %86 : vector<16x16xi1>, vector<16x16xi32>
      %99 = tpu.iota {dimensions = array<i32: 1>} : vector<16x16xi32>
      %c8_i32_51 = arith.constant 8 : i32
      %c0_i32_52 = arith.constant 0 : i32
      %100 = arith.cmpi eq, %c8_i32_51, %c0_i32_52 : i32
      %c1_i32_53 = arith.constant 1 : i32
      %101 = arith.select %100, %c1_i32_53, %c8_i32_51 : i32
      %102 = vector.broadcast %101 : i32 to vector<16x16xi32>
      %103 = arith.remsi %99, %102 : vector<16x16xi32>
      %c0_i32_54 = arith.constant 0 : i32
      %104 = vector.broadcast %c0_i32_54 : i32 to vector<16x16xi32>
      %105 = arith.cmpi ne, %103, %104 : vector<16x16xi32>
      %c0_i32_55 = arith.constant 0 : i32
      %106 = vector.broadcast %c0_i32_55 : i32 to vector<16x16xi32>
      %107 = arith.cmpi slt, %103, %106 : vector<16x16xi32>
      %c0_i32_56 = arith.constant 0 : i32
      %108 = arith.cmpi slt, %101, %c0_i32_56 : i32
      %109 = vector.broadcast %108 : i1 to vector<16x16xi1>
      %110 = vector.broadcast %109 : vector<16x16xi1> to vector<16x16xi1>
      %111 = arith.xori %107, %110 : vector<16x16xi1>
      %112 = arith.andi %111, %105 : vector<16x16xi1>
      %113 = vector.broadcast %101 : i32 to vector<16x16xi32>
      %114 = arith.addi %103, %113 : vector<16x16xi32>
      %115 = arith.select %112, %114, %103 : vector<16x16xi1>, vector<16x16xi32>
      %116 = arith.cmpi eq, %98, %115 : vector<16x16xi32>
      %117 = arith.mulf %81, %81 : vector<16x16xf32>
      %cst_57 = arith.constant 0.000000e+00 : f32
      %118 = vector.broadcast %cst_57 : f32 to vector<16x16xf32>
      %119 = arith.select %116, %117, %118 : vector<16x16xi1>, vector<16x16xf32>
      %120 = vector.shape_cast %119 : vector<16x16xf32> to vector<2x8x16xf32>
      %cst_58 = arith.constant dense<0.000000e+00> : vector<2x8xf32>
      %121 = vector.multi_reduction <add>, %120, %cst_58 [2] : vector<2x8x16xf32> to vector<2x8xf32>
      %122 = vector.shape_cast %121 : vector<2x8xf32> to vector<2x8x1xf32>
      %cst_59 = arith.constant dense<0.000000e+00> : vector<8x1xf32>
      %123 = vector.multi_reduction <add>, %122, %cst_59 [0] : vector<2x8x1xf32> to vector<8x1xf32>
      %cst_60 = arith.constant 2.000000e+00 : f32
      %124 = vector.broadcast %cst_60 : f32 to vector<8x1xf32>
      %125 = arith.mulf %124, %123 : vector<8x1xf32>
      %126 = arith.subf %80, %125 : vector<8x1xf32>
      %c0_61 = arith.constant 0 : index
      %c0_62 = arith.constant 0 : index
      %127 = vector.load %arg7[%c0_61, %c0_62] : memref<16x16xf32, #tpu.memory_space<vmem>>, vector<16x16xf32>
      %128 = tpu.iota {dimensions = array<i32: 0>} : vector<16x16xi32>
      %c8_i32_63 = arith.constant 8 : i32
      %c0_i32_64 = arith.constant 0 : i32
      %129 = arith.cmpi eq, %c8_i32_63, %c0_i32_64 : i32
      %c1_i32_65 = arith.constant 1 : i32
      %130 = arith.select %129, %c1_i32_65, %c8_i32_63 : i32
      %131 = vector.broadcast %130 : i32 to vector<16x16xi32>
      %132 = arith.remsi %128, %131 : vector<16x16xi32>
      %c0_i32_66 = arith.constant 0 : i32
      %133 = vector.broadcast %c0_i32_66 : i32 to vector<16x16xi32>
      %134 = arith.cmpi ne, %132, %133 : vector<16x16xi32>
      %c0_i32_67 = arith.constant 0 : i32
      %135 = vector.broadcast %c0_i32_67 : i32 to vector<16x16xi32>
      %136 = arith.cmpi slt, %132, %135 : vector<16x16xi32>
      %c0_i32_68 = arith.constant 0 : i32
      %137 = arith.cmpi slt, %130, %c0_i32_68 : i32
      %138 = vector.broadcast %137 : i1 to vector<16x16xi1>
      %139 = vector.broadcast %138 : vector<16x16xi1> to vector<16x16xi1>
      %140 = arith.xori %136, %139 : vector<16x16xi1>
      %141 = arith.andi %140, %134 : vector<16x16xi1>
      %142 = vector.broadcast %130 : i32 to vector<16x16xi32>
      %143 = arith.addi %132, %142 : vector<16x16xi32>
      %144 = arith.select %141, %143, %132 : vector<16x16xi1>, vector<16x16xi32>
      %145 = tpu.iota {dimensions = array<i32: 1>} : vector<16x16xi32>
      %c8_i32_69 = arith.constant 8 : i32
      %c0_i32_70 = arith.constant 0 : i32
      %146 = arith.cmpi eq, %c8_i32_69, %c0_i32_70 : i32
      %c1_i32_71 = arith.constant 1 : i32
      %147 = arith.select %146, %c1_i32_71, %c8_i32_69 : i32
      %148 = vector.broadcast %147 : i32 to vector<16x16xi32>
      %149 = arith.remsi %145, %148 : vector<16x16xi32>
      %c0_i32_72 = arith.constant 0 : i32
      %150 = vector.broadcast %c0_i32_72 : i32 to vector<16x16xi32>
      %151 = arith.cmpi ne, %149, %150 : vector<16x16xi32>
      %c0_i32_73 = arith.constant 0 : i32
      %152 = vector.broadcast %c0_i32_73 : i32 to vector<16x16xi32>
      %153 = arith.cmpi slt, %149, %152 : vector<16x16xi32>
      %c0_i32_74 = arith.constant 0 : i32
      %154 = arith.cmpi slt, %147, %c0_i32_74 : i32
      %155 = vector.broadcast %154 : i1 to vector<16x16xi1>
      %156 = vector.broadcast %155 : vector<16x16xi1> to vector<16x16xi1>
      %157 = arith.xori %153, %156 : vector<16x16xi1>
      %158 = arith.andi %157, %151 : vector<16x16xi1>
      %159 = vector.broadcast %147 : i32 to vector<16x16xi32>
      %160 = arith.addi %149, %159 : vector<16x16xi32>
      %161 = arith.select %158, %160, %149 : vector<16x16xi1>, vector<16x16xi32>
      %162 = arith.cmpi eq, %144, %161 : vector<16x16xi32>
      %163 = arith.mulf %127, %127 : vector<16x16xf32>
      %cst_75 = arith.constant 0.000000e+00 : f32
      %164 = vector.broadcast %cst_75 : f32 to vector<16x16xf32>
      %165 = arith.select %162, %163, %164 : vector<16x16xi1>, vector<16x16xf32>
      %166 = vector.shape_cast %165 : vector<16x16xf32> to vector<2x8x16xf32>
      %cst_76 = arith.constant dense<0.000000e+00> : vector<2x8xf32>
      %167 = vector.multi_reduction <add>, %166, %cst_76 [2] : vector<2x8x16xf32> to vector<2x8xf32>
      %168 = vector.shape_cast %167 : vector<2x8xf32> to vector<2x8x1xf32>
      %cst_77 = arith.constant dense<0.000000e+00> : vector<8x1xf32>
      %169 = vector.multi_reduction <add>, %168, %cst_77 [0] : vector<2x8x1xf32> to vector<8x1xf32>
      %170 = arith.addf %126, %169 : vector<8x1xf32>
      %cst_78 = arith.constant 0.000000e+00 : f32
      %171 = vector.broadcast %cst_78 : f32 to vector<8x1xf32>
      %172 = arith.maximumf %170, %171 : vector<8x1xf32>
      %173 = math.sqrt %172 : vector<8x1xf32>
      %c0_79 = arith.constant 0 : index
      %c0_80 = arith.constant 0 : index
      %c0_81 = arith.constant 0 : index
      %174 = vector.load %arg4[%c0_79, %c0_80, %c0_81] : memref<1x8x1xf32, #tpu.memory_space<vmem>>, vector<1x8x1xf32>
      %175 = vector.shape_cast %174 : vector<1x8x1xf32> to vector<8x1xf32>
      %176 = vector.shape_cast %173 : vector<8x1xf32> to vector<1x8x1xf32>
      tpu.vector_store %arg4[%c0_79, %c0_80, %c0_81], %176 {strides = array<i32>} : memref<1x8x1xf32, #tpu.memory_space<vmem>>, vector<1x8x1xf32>,
    } else {
    }
    return
  }
  func.func @transform_0(%arg0: i32, %arg1: i32) -> (i32, i32, i32) {
    %c0_i32 = arith.constant 0 : i32
    %c0_i32_0 = arith.constant 0 : i32
    return %c0_i32, %arg0, %arg1 : i32, i32, i32
  }
  func.func @transform_1(%arg0: i32, %arg1: i32) -> (i32, i32, i32) {
    %c0_i32 = arith.constant 0 : i32
    %c0_i32_0 = arith.constant 0 : i32
    return %c0_i32, %arg0, %arg1 : i32, i32, i32
  }
  func.func @transform_2(%arg0: i32, %arg1: i32) -> (i32, i32, i32) {
    %c0_i32 = arith.constant 0 : i32
    %c0_i32_0 = arith.constant 0 : i32
    %c0_i32_1 = arith.constant 0 : i32
    return %arg0, %c0_i32, %c0_i32_0 : i32, i32, i32
  }
}

</mosaic_0001>

<llo_original>
// kernel: tpu_custom_call.1
$region0: #{tpu_custom_call.1}
  #allocation0 [shape = 'u32[]', space=smem, size = 0x4, offset = 0x4, fixed_abs, tag = 'smem constant byte address 0x4 - core index']
  #allocation1 [shape = 'u32[144,128]{1,0:T(1,128)}', space=vmem, size = 0x12000, scoped, tag = 'internal scratch']
  #allocation2 [shape = 'f32[16,16]{1,0:T(8,128)}', space=vmem, size = 0x2000, scoped, tag = 'scratch operand']
  #allocation3 [shape = 'f32[16,16]{1,0:T(8,128)}', space=vmem, size = 0x2000, scoped, tag = 'scratch operand']
  #allocation4 [shape = 'f32[16,16]{1,0:T(8,128)}', space=vmem, size = 0x2000, scoped, tag = 'scratch operand']
  %s0 = inlined_call_operand.hbm [shape: f32[2,8,256], index: 0, kind: input, shape index: {}]
  %s1 = inlined_call_operand.hbm [shape: f32[2,8,256], index: 1, kind: input, shape index: {}]
  %s2 = inlined_call_operand.vmem [shape: f32[1,8,1], index: 2, kind: output, shape index: {}]
  %s3 = sld [smem:[#allocation0]]
  $region34: #{tpu_custom_call.1} parent=0
    _
  %s5 = ssub.s32 1, %s3
  %s6 = scalar_select 0, %s5, %s3
  $region1: #{tpu_custom_call.1} parent=0
    #allocation5 [shape = 'u8[16384]{0}', space=vmem, size = 0x4000, scoped, tag = 'input window, operand 0, single buffered']
    #allocation6 [shape = 's32[1]{0}', space=sflag, size = 0x4, scoped, tag = 'scoped memory for tpu_custom_call.1']
    #allocation7 [shape = 'u8[16384]{0}', space=vmem, size = 0x4000, scoped, tag = 'input window, operand 1, single buffered']
    #allocation8 [shape = 's32[1]{0}', space=sflag, size = 0x4, scoped, tag = 'scoped memory for tpu_custom_call.1']
    %7 = vsyncpa [#allocation6], 0
    %8 = vsyncpa [#allocation8], 0
    // Predicated region
    $region2: #{tpu_custom_call.1} parent=1 // pred_check
      _
    $region3: #{tpu_custom_call.1} parent=1 // pred_check_branch
      %10 = sbr.rel (0) target = $region5
    $region4: #{tpu_custom_call.1} parent=1 // pred_region
      %s12 = ssub.s32 512, 512
      %13 = vsyncadd [#allocation6], %s12
      %s14 = sshll.u32 [#allocation5], 4
      %s15 = int_to_ptr.vmem [resolvable:$true] %s14
      %20 = dma.hbm_to_vmem [thread:$0]  %s0, 512, %s15, [#allocation6], 256, 256, 16
    $region5: #{tpu_custom_call.1} parent=1 // pred_fallthru
      _
    // Predicated region
    $region6: #{tpu_custom_call.1} parent=1 // pred_check
      _
    $region7: #{tpu_custom_call.1} parent=1 // pred_check_branch
      %22 = sbr.rel (0) target = $region9
    $region8: #{tpu_custom_call.1} parent=1 // pred_region
      %s24 = ssub.s32 512, 512
      %25 = vsyncadd [#allocation8], %s24
      %s26 = sshll.u32 [#allocation7], 4
      %s27 = int_to_ptr.vmem [resolvable:$true] %s26
      %32 = dma.hbm_to_vmem [thread:$0]  %s1, 512, %s27, [#allocation8], 256, 256, 16
    $region9: #{tpu_custom_call.1} parent=1 // pred_fallthru
      _
    // Predicated region
    $region10: #{tpu_custom_call.1} parent=1 // pred_check
      _
    $region11: #{tpu_custom_call.1} parent=1 // pred_check_branch
      %34 = sbr.rel (0) target = $region13
    $region12: #{tpu_custom_call.1} parent=1 // pred_region
      %35 = dma.done [#allocation6], 512
    $region13: #{tpu_custom_call.1} parent=1 // pred_fallthru
      _
    // Predicated region
    $region14: #{tpu_custom_call.1} parent=1 // pred_check
      _
    $region15: #{tpu_custom_call.1} parent=1 // pred_check_branch
      %37 = sbr.rel (0) target = $region17
    $region16: #{tpu_custom_call.1} parent=1 // pred_region
      %38 = dma.done [#allocation8], 512
    $region17: #{tpu_custom_call.1} parent=1 // pred_fallthru
      _
    %p39 = scmp.eq.s32.totalorder 0, 0
    // Predicated region
    $region18: #{tpu_custom_call.1} parent=1 // pred_check
      %p40 = pneg %p39
    $region19: #{tpu_custom_call.1} parent=1 // pred_check_branch
      %42 = sbr.rel (%p40) target = $region21
    $region20: #{tpu_custom_call.1} parent=1 // pred_region
      %vm43 = vcmask 130048
      %44 = vst.msk [vmem:[#allocation2] sm:$0xff] %vm43, 0.0
      %45 = vst.msk [vmem:[#allocation2 + $0x8] sm:$0xff] %vm43, 0.0
      %46 = vst.msk [vmem:[#allocation3] sm:$0xff] %vm43, 0.0
      %47 = vst.msk [vmem:[#allocation3 + $0x8] sm:$0xff] %vm43, 0.0
      %48 = vst.msk [vmem:[#allocation4] sm:$0xff] %vm43, 0.0
      %49 = vst.msk [vmem:[#allocation4 + $0x8] sm:$0xff] %vm43, 0.0
    $region21: #{tpu_custom_call.1} parent=1 // pred_fallthru
      _
    %v50 = vld [vmem:[#allocation5] sm:$0xff]
    %v51 = vld [vmem:[#allocation5 + $0x8] sm:$0xff]
    %v52 = vld [vmem:[#allocation5 + $0x10] sm:$0xff]
    %v53 = vld [vmem:[#allocation5 + $0x18] sm:$0xff]
    %v54 = vld [vmem:[#allocation7] sm:$0xff]
    %v55 = vld [vmem:[#allocation7 + $0x8] sm:$0xff]
    %v56 = vld [vmem:[#allocation7 + $0x10] sm:$0xff]
    %v57 = vld [vmem:[#allocation7 + $0x18] sm:$0xff]
    %v58 = vadd.f32 %v50, %v52
    %v59 = vadd.f32 %v51, %v53
    %v60 = vrcp.pop 2.0
    %v61 = vmul.f32 %v58, %v60
    %v62 = vmul.f32 %v59, %v60
    %v63 = vsub.f32 %v50, %v61
    %v64 = vsub.f32 %v51, %v62
    %v65 = vsub.f32 %v52, %v61
    %v66 = vsub.f32 %v53, %v62
    %v67 = vadd.f32 %v54, %v56
    %v68 = vadd.f32 %v55, %v57
    %v69 = vmul.f32 %v67, %v60
    %v70 = vmul.f32 %v68, %v60
    %v71 = vsub.f32 %v54, %v69
    %v72 = vsub.f32 %v55, %v70
    %v73 = vsub.f32 %v56, %v69
    %v74 = vsub.f32 %v57, %v70
    %v75 = vld [vmem:[#allocation2] sm:$0xff]
    %v76 = vld [vmem:[#allocation2 + $0x8] sm:$0xff]
    %77 = vmatprep.subr.mxu0 %v64
    %78 = vmatpush1.xpose.msra.mxu0 %v63
    %79 = vmatprep.subr.mxu0 %v66
    %80 = vmatpush1.xpose.msra.mxu0 %v65
    %81 = vmatprep.subr.mxu0 0.0
    %82 = vmatpush1.xpose.msra.mxu0 0.0
    %83 = vmatprep.subr.mxu0 0.0
    %84 = vmatpush1.xpose.msra.mxu0 0.0
    %85 = vmatprep.subr.mxu0 0.0
    %86 = vmatpush1.xpose.msra.mxu0 0.0
    %87 = vmatprep.subr.mxu0 0.0
    %88 = vmatpush1.xpose.msra.mxu0 0.0
    %89 = vmatprep.subr.mxu0 0.0
    %90 = vmatpush1.xpose.msra.mxu0 0.0
    %91 = vmatprep.subr.mxu0 0.0
    %92 = vmatpush1.xpose.msra.mxu0 0.0
    %93 = vmatprep.subr.mxu0 0.0
    %94 = vmatpush1.xpose.msra.mxu0 0.0
    %95 = vmatprep.subr.mxu0 0.0
    %96 = vmatpush1.xpose.msra.mxu0 0.0
    %97 = vmatprep.subr.mxu0 0.0
    %98 = vmatpush1.xpose.msra.mxu0 0.0
    %99 = vmatprep.subr.mxu0 0.0
    %100 = vmatpush1.xpose.msra.mxu0 0.0
    %101 = vmatprep.subr.mxu0 0.0
    %102 = vmatpush1.xpose.msra.mxu0 0.0
    %103 = vmatprep.subr.mxu0 0.0
    %104 = vmatpush1.xpose.msra.mxu0 0.0
    %105 = vmatprep.subr.mxu0 0.0
    %106 = vmatpush1.xpose.msra.mxu0 0.0
    %107 = vmatprep.subr.mxu0 0.0
    %108 = vmatpush1.xpose.msra.mxu0 0.0
    %109 = vmatprep.subr.mxu0 0.0
    %110 = vmatpush1.xpose.msra.mxu0 0.0
    %111 = vmatprep.subr.mxu0 0.0
    %112 = vmatpush1.xpose.msra.mxu0 0.0
    %113 = vmatprep.subr.mxu0 0.0
    %114 = vmatpush1.xpose.msra.mxu0 0.0
    %115 = vmatprep.subr.mxu0 0.0
    %116 = vmatpush1.xpose.msra.mxu0 0.0
    %117 = vmatprep.subr.mxu0 0.0
    %118 = vmatpush1.xpose.msra.mxu0 0.0
    %119 = vmatprep.subr.mxu0 0.0
    %120 = vmatpush1.xpose.msra.mxu0 0.0
    %121 = vmatprep.subr.mxu0 0.0
    %122 = vmatpush1.xpose.msra.mxu0 0.0
    %123 = vmatprep.subr.mxu0 0.0
    %124 = vmatpush1.xpose.msra.mxu0 0.0
    %125 = vmatprep.subr.mxu0 0.0
    %126 = vmatpush1.xpose.msra.mxu0 0.0
    %127 = vmatprep.subr.mxu0 0.0
    %128 = vmatpush1.xpose.msra.mxu0 0.0
    %129 = vmatprep.subr.mxu0 0.0
    %130 = vmatpush1.xpose.msra.mxu0 0.0
    %131 = vmatprep.subr.mxu0 0.0
    %132 = vmatpush1.xpose.msra.mxu0 0.0
    %133 = vmatprep.subr.mxu0 0.0
    %134 = vmatpush1.xpose.msra.mxu0 0.0
    %135 = vmatprep.subr.mxu0 0.0
    %136 = vmatpush1.xpose.msra.mxu0 0.0
    %137 = vmatprep.subr.mxu0 0.0
    %138 = vmatpush1.xpose.msra.mxu0 0.0
    %139 = vmatprep.subr.mxu0 0.0
    %140 = vmatpush1.xpose.msra.mxu0 0.0
    %141 = vmatprep.mubr.f32.mxu0 %v64
    %142 = vmatmul.mubr.f32.gmra.mrb[0].mxu0 %v63
    %v143 = vpop.f32.mrb[0].mxu0
    %v144 = vadd.f32 0.0, %v143
    %v145 = vpop.f32.mrb[0].mxu0
    %146 = vmatprep.mubr.f32.mxu0 %v66
    %147 = vmatmul.mubr.f32.gmra.mrb[0].mxu0 %v65
    %v148 = vpop.f32.mrb[0].mxu0
    %v149 = vadd.f32 0.0, %v148
    %v150 = vpop.f32.mrb[0].mxu0
    %151 = vdwg.mxu0
    %v152 = vadd.f32 %v75, %v144
    %v153 = vadd.f32 %v76, %v149
    %vm154 = vcmask 130048
    %155 = vst.msk [vmem:[#allocation2] sm:$0xff] %vm154, %v152
    %156 = vst.msk [vmem:[#allocation2 + $0x8] sm:$0xff] %vm154, %v153
    %v157 = vld [vmem:[#allocation3] sm:$0xff]
    %v158 = vld [vmem:[#allocation3 + $0x8] sm:$0xff]
    %159 = vmatprep.subr.mxu0 %v72
    %160 = vmatpush1.xpose.msra.mxu0 %v71
    %161 = vmatprep.subr.mxu0 %v74
    %162 = vmatpush1.xpose.msra.mxu0 %v73
    %163 = vmatprep.subr.mxu0 0.0
    %164 = vmatpush1.xpose.msra.mxu0 0.0
    %165 = vmatprep.subr.mxu0 0.0
    %166 = vmatpush1.xpose.msra.mxu0 0.0
    %167 = vmatprep.subr.mxu0 0.0
    %168 = vmatpush1.xpose.msra.mxu0 0.0
    %169 = vmatprep.subr.mxu0 0.0
    %170 = vmatpush1.xpose.msra.mxu0 0.0
    %171 = vmatprep.subr.mxu0 0.0
    %172 = vmatpush1.xpose.msra.mxu0 0.0
    %173 = vmatprep.subr.mxu0 0.0
    %174 = vmatpush1.xpose.msra.mxu0 0.0
    %175 = vmatprep.subr.mxu0 0.0
    %176 = vmatpush1.xpose.msra.mxu0 0.0
    %177 = vmatprep.subr.mxu0 0.0
    %178 = vmatpush1.xpose.msra.mxu0 0.0
    %179 = vmatprep.subr.mxu0 0.0
    %180 = vmatpush1.xpose.msra.mxu0 0.0
    %181 = vmatprep.subr.mxu0 0.0
    %182 = vmatpush1.xpose.msra.mxu0 0.0
    %183 = vmatprep.subr.mxu0 0.0
    %184 = vmatpush1.xpose.msra.mxu0 0.0
    %185 = vmatprep.subr.mxu0 0.0
    %186 = vmatpush1.xpose.msra.mxu0 0.0
    %187 = vmatprep.subr.mxu0 0.0
    %188 = vmatpush1.xpose.msra.mxu0 0.0
    %189 = vmatprep.subr.mxu0 0.0
    %190 = vmatpush1.xpose.msra.mxu0 0.0
    %191 = vmatprep.subr.mxu0 0.0
    %192 = vmatpush1.xpose.msra.mxu0 0.0
    %193 = vmatprep.subr.mxu0 0.0
    %194 = vmatpush1.xpose.msra.mxu0 0.0
    %195 = vmatprep.subr.mxu0 0.0
    %196 = vmatpush1.xpose.msra.mxu0 0.0
    %197 = vmatprep.subr.mxu0 0.0
    %198 = vmatpush1.xpose.msra.mxu0 0.0
    %199 = vmatprep.subr.mxu0 0.0
    %200 = vmatpush1.xpose.msra.mxu0 0.0
    %201 = vmatprep.subr.mxu0 0.0
    %202 = vmatpush1.xpose.msra.mxu0 0.0
    %203 = vmatprep.subr.mxu0 0.0
    %204 = vmatpush1.xpose.msra.mxu0 0.0
    %205 = vmatprep.subr.mxu0 0.0
    %206 = vmatpush1.xpose.msra.mxu0 0.0
    %207 = vmatprep.subr.mxu0 0.0
    %208 = vmatpush1.xpose.msra.mxu0 0.0
    %209 = vmatprep.subr.mxu0 0.0
    %210 = vmatpush1.xpose.msra.mxu0 0.0
    %211 = vmatprep.subr.mxu0 0.0
    %212 = vmatpush1.xpose.msra.mxu0 0.0
    %213 = vmatprep.subr.mxu0 0.0
    %214 = vmatpush1.xpose.msra.mxu0 0.0
    %215 = vmatprep.subr.mxu0 0.0
    %216 = vmatpush1.xpose.msra.mxu0 0.0
    %217 = vmatprep.subr.mxu0 0.0
    %218 = vmatpush1.xpose.msra.mxu0 0.0
    %219 = vmatprep.subr.mxu0 0.0
    %220 = vmatpush1.xpose.msra.mxu0 0.0
    %221 = vmatprep.subr.mxu0 0.0
    %222 = vmatpush1.xpose.msra.mxu0 0.0
    %223 = vmatprep.mubr.f32.mxu0 %v64
    %224 = vmatmul.mubr.f32.gmra.mrb[0].mxu0 %v63
    %v225 = vpop.f32.mrb[0].mxu0
    %v226 = vadd.f32 0.0, %v225
    %v227 = vpop.f32.mrb[0].mxu0
    %228 = vmatprep.mubr.f32.mxu0 %v66
    %229 = vmatmul.mubr.f32.gmra.mrb[0].mxu0 %v65
    %v230 = vpop.f32.mrb[0].mxu0
    %v231 = vadd.f32 0.0, %v230
    %v232 = vpop.f32.mrb[0].mxu0
    %233 = vdwg.mxu0
    %v234 = vadd.f32 %v157, %v226
    %v235 = vadd.f32 %v158, %v231
    %236 = vst.msk [vmem:[#allocation3] sm:$0xff] %vm154, %v234
    %237 = vst.msk [vmem:[#allocation3 + $0x8] sm:$0xff] %vm154, %v235
    %v238 = vld [vmem:[#allocation4] sm:$0xff]
    %v239 = vld [vmem:[#allocation4 + $0x8] sm:$0xff]
    %240 = vmatprep.subr.mxu0 %v72
    %241 = vmatpush1.xpose.msra.mxu0 %v71
    %242 = vmatprep.subr.mxu0 %v74
    %243 = vmatpush1.xpose.msra.mxu0 %v73
    %244 = vmatprep.subr.mxu0 0.0
    %245 = vmatpush1.xpose.msra.mxu0 0.0
    %246 = vmatprep.subr.mxu0 0.0
    %247 = vmatpush1.xpose.msra.mxu0 0.0
    %248 = vmatprep.subr.mxu0 0.0
    %249 = vmatpush1.xpose.msra.mxu0 0.0
    %250 = vmatprep.subr.mxu0 0.0
    %251 = vmatpush1.xpose.msra.mxu0 0.0
    %252 = vmatprep.subr.mxu0 0.0
    %253 = vmatpush1.xpose.msra.mxu0 0.0
    %254 = vmatprep.subr.mxu0 0.0
    %255 = vmatpush1.xpose.msra.mxu0 0.0
    %256 = vmatprep.subr.mxu0 0.0
    %257 = vmatpush1.xpose.msra.mxu0 0.0
    %258 = vmatprep.subr.mxu0 0.0
    %259 = vmatpush1.xpose.msra.mxu0 0.0
    %260 = vmatprep.subr.mxu0 0.0
    %261 = vmatpush1.xpose.msra.mxu0 0.0
    %262 = vmatprep.subr.mxu0 0.0
    %263 = vmatpush1.xpose.msra.mxu0 0.0
    %264 = vmatprep.subr.mxu0 0.0
    %265 = vmatpush1.xpose.msra.mxu0 0.0
    %266 = vmatprep.subr.mxu0 0.0
    %267 = vmatpush1.xpose.msra.mxu0 0.0
    %268 = vmatprep.subr.mxu0 0.0
    %269 = vmatpush1.xpose.msra.mxu0 0.0
    %270 = vmatprep.subr.mxu0 0.0
    %271 = vmatpush1.xpose.msra.mxu0 0.0
    %272 = vmatprep.subr.mxu0 0.0
    %273 = vmatpush1.xpose.msra.mxu0 0.0
    %274 = vmatprep.subr.mxu0 0.0
    %275 = vmatpush1.xpose.msra.mxu0 0.0
    %276 = vmatprep.subr.mxu0 0.0
    %277 = vmatpush1.xpose.msra.mxu0 0.0
    %278 = vmatprep.subr.mxu0 0.0
    %279 = vmatpush1.xpose.msra.mxu0 0.0
    %280 = vmatprep.subr.mxu0 0.0
    %281 = vmatpush1.xpose.msra.mxu0 0.0
    %282 = vmatprep.subr.mxu0 0.0
    %283 = vmatpush1.xpose.msra.mxu0 0.0
    %284 = vmatprep.subr.mxu0 0.0
    %285 = vmatpush1.xpose.msra.mxu0 0.0
    %286 = vmatprep.subr.mxu0 0.0
    %287 = vmatpush1.xpose.msra.mxu0 0.0
    %288 = vmatprep.subr.mxu0 0.0
    %289 = vmatpush1.xpose.msra.mxu0 0.0
    %290 = vmatprep.subr.mxu0 0.0
    %291 = vmatpush1.xpose.msra.mxu0 0.0
    %292 = vmatprep.subr.mxu0 0.0
    %293 = vmatpush1.xpose.msra.mxu0 0.0
    %294 = vmatprep.subr.mxu0 0.0
    %295 = vmatpush1.xpose.msra.mxu0 0.0
    %296 = vmatprep.subr.mxu0 0.0
    %297 = vmatpush1.xpose.msra.mxu0 0.0
    %298 = vmatprep.subr.mxu0 0.0
    %299 = vmatpush1.xpose.msra.mxu0 0.0
    %300 = vmatprep.subr.mxu0 0.0
    %301 = vmatpush1.xpose.msra.mxu0 0.0
    %302 = vmatprep.subr.mxu0 0.0
    %303 = vmatpush1.xpose.msra.mxu0 0.0
    %304 = vmatprep.mubr.f32.mxu0 %v72
    %305 = vmatmul.mubr.f32.gmra.mrb[0].mxu0 %v71
    %v306 = vpop.f32.mrb[0].mxu0
    %v307 = vadd.f32 0.0, %v306
    %v308 = vpop.f32.mrb[0].mxu0
    %309 = vmatprep.mubr.f32.mxu0 %v74
    %310 = vmatmul.mubr.f32.gmra.mrb[0].mxu0 %v73
    %v311 = vpop.f32.mrb[0].mxu0
    %v312 = vadd.f32 0.0, %v311
    %v313 = vpop.f32.mrb[0].mxu0
    %314 = vdwg.mxu0
    %v315 = vadd.f32 %v238, %v307
    %v316 = vadd.f32 %v239, %v312
    %317 = vst.msk [vmem:[#allocation4] sm:$0xff] %vm154, %v315
    %318 = vst.msk [vmem:[#allocation4 + $0x8] sm:$0xff] %vm154, %v316
    // Predicated region
    $region22: #{tpu_custom_call.1} parent=1 // pred_check
      %p319 = pneg %p39
    $region23: #{tpu_custom_call.1} parent=1 // pred_check_branch
      %321 = sbr.rel (%p319) target = $region25
    $region24: #{tpu_custom_call.1} parent=1 // pred_region
      %v322 = vld [vmem:[#allocation2] sm:$0xff]
      %v323 = vld [vmem:[#allocation2 + $0x8] sm:$0xff]
      %v324 = vlaneseq
      %v325 = vshrl.u32 %v324, 7
      %v326 = vadd.s32 %v325, 8
      %vm327 = vcmp.lt.s32.totalorder %v325, 0
      %v328 = vsub.s32 0, %v325
      %v329 = vsel %vm327, %v328, %v325
      %v330 = vshrl.u32 %v329, 3
      %v331 = vand.u32 %v329, 7
      %v332 = vsub.s32 0, %v331
      %v333 = vsel %vm327, %v332, %v331
      %vm334 = vcmp.lt.s32.totalorder %v326, 0
      %v335 = vsub.s32 0, %v326
      %v336 = vsel %vm334, %v335, %v326
      %v337 = vshrl.u32 %v336, 3
      %v338 = vand.u32 %v336, 7
      %v339 = vsub.s32 0, %v338
      %v340 = vsel %vm334, %v339, %v338
      %vm341 = vcmp.ne.s32.totalorder %v333, 0
      %vm342 = vcmp.ne.s32.totalorder %v340, 0
      %vm343 = vcmp.lt.s32.totalorder %v333, 0
      %vm344 = vcmp.lt.s32.totalorder %v340, 0
      %vm345 = vmand %vm343, %vm341
      %vm346 = vmand %vm344, %vm342
      %v347 = vadd.s32 %v333, 8
      %v348 = vadd.s32 %v340, 8
      %v349 = vsel %vm345, %v347, %v333
      %v350 = vsel %vm346, %v348, %v340
      %v351 = vlaneseq
      %v352 = vand.u32 %v351, 127
      %vm353 = vcmp.lt.s32.totalorder %v352, 0
      %v354 = vsub.s32 0, %v352
      %v355 = vsel %vm353, %v354, %v352
      %v356 = vshrl.u32 %v355, 3
      %v357 = vand.u32 %v355, 7
      %v358 = vsub.s32 0, %v357
      %v359 = vsel %vm353, %v358, %v357
      %vm360 = vcmp.ne.s32.totalorder %v359, 0
      %vm361 = vcmp.lt.s32.totalorder %v359, 0
      %vm362 = vmand %vm361, %vm360
      %v363 = vadd.s32 %v359, 8
      %v364 = vsel %vm362, %v363, %v359
      %vm365 = vcmp.eq.s32.totalorder %v349, %v364
      %vm366 = vcmp.eq.s32.totalorder %v350, %v364
      %v367 = vmul.f32 %v322, %v322
      %v368 = vmul.f32 %v323, %v323
      %v369 = vsel %vm365, %v367, 0.0
      %v370 = vsel %vm366, %v368, 0.0
      %v371 = vsel %vm154, %v369, 0.0
      %372 = vadd.xlane.f32.xlu0 %v371
      %v373 = vpop.xlane.xlu0 %372
      %v374 = vsel %vm154, %v370, 0.0
      %375 = vadd.xlane.f32.xlu0 %v374
      %v376 = vpop.xlane.xlu0 %375
      %v377 = vadd.f32 %v373, %v376
      %v378 = vld [vmem:[#allocation3] sm:$0xff]
      %v379 = vld [vmem:[#allocation3 + $0x8] sm:$0xff]
      %v380 = vmul.f32 %v378, %v378
      %v381 = vmul.f32 %v379, %v379
      %v382 = vsel %vm365, %v380, 0.0
      %v383 = vsel %vm366, %v381, 0.0
      %v384 = vsel %vm154, %v382, 0.0
      %385 = vadd.xlane.f32.xlu0 %v384
      %v386 = vpop.xlane.xlu0 %385
      %v387 = vsel %vm154, %v383, 0.0
      %388 = vadd.xlane.f32.xlu0 %v387
      %v389 = vpop.xlane.xlu0 %388
      %v390 = vadd.f32 %v386, %v389
      %v391 = vmul.f32 %v390, 2.0
      %v392 = vsub.f32 %v377, %v391
      %v393 = vld [vmem:[#allocation4] sm:$0xff]
      %v394 = vld [vmem:[#allocation4 + $0x8] sm:$0xff]
      %v395 = vmul.f32 %v393, %v393
      %v396 = vmul.f32 %v394, %v394
      %v397 = vsel %vm365, %v395, 0.0
      %v398 = vsel %vm366, %v396, 0.0
      %v399 = vsel %vm154, %v397, 0.0
      %400 = vadd.xlane.f32.xlu0 %v399
      %v401 = vpop.xlane.xlu0 %400
      %v402 = vsel %vm154, %v398, 0.0
      %403 = vadd.xlane.f32.xlu0 %v402
      %v404 = vpop.xlane.xlu0 %403
      %v405 = vadd.f32 %v401, %v404
      %v406 = vadd.f32 %v392, %v405
      %v407 = vmax.f32 %v406, 0.0
      %v408 = vrsqrt.pop %v407
      %v409 = vmul.f32 %v407, %v408
      %vm410 = vcmp.eq.f32.partialorder %v407, inf
      %v411 = vsel %vm410, %v407, %v409
      %vm412 = vcmp.eq.f32.partialorder %v407, 0.0
      %v413 = vand.u32 %v407, 2147483648
      %v414 = vsel %vm412, %v413, %v411
      %vm415 = vcmask 7168
      %416 = vst.msk [vmem:[%s2] sm:$0xff] %vm415, %v414
    $region25: #{tpu_custom_call.1} parent=1 // pred_fallthru
      _
    // Predicated region
    $region26: #{tpu_custom_call.1} parent=1 // pred_check
      _
    $region27: #{tpu_custom_call.1} parent=1 // pred_check_branch
      %418 = sbr.rel (0) target = $region29
    $region28: #{tpu_custom_call.1} parent=1 // pred_region
      _
    $region29: #{tpu_custom_call.1} parent=1 // pred_fallthru
      _
    // Predicated region
    $region30: #{tpu_custom_call.1} parent=1 // pred_check
      _
    $region31: #{tpu_custom_call.1} parent=1 // pred_check_branch
      %420 = sbr.rel (0) target = $region33
    $region32: #{tpu_custom_call.1} parent=1 // pred_region
      _
    $region33: #{tpu_custom_call.1} parent=1 // pred_fallthru
      _
    %421 = vsyncpa [#allocation6], 1
    %422 = vsyncpa [#allocation8], 1

</llo_original>
